<compile_context>
chip_gen: v7x
topology: tpu7x:2x2x1
jax: 0.10.0
libtpu: 0.0.40
codegen_flags: <defaults>
</compile_context>

<pallas_src>
import jax
import jax.numpy as jnp
from jax.experimental import pallas as pl
from jax.experimental.pallas import tpu as pltpu

_LANES = 128              # TPU lane width
_MAX_UNROLL_CHUNKS = 256  # cap for the unrolled chunked reduction


def _se_kernel(x_ref, w1t_ref, b1_ref, w2t_ref, b2_ref, o_ref):
    # x_ref: (TB, C, S) batch tile.  Keep it in its native dtype — no full
    # f32 copy; promotion happens per 128-lane chunk inside the reduction.
    tb, c, s = x_ref.shape
    x = x_ref[...]

    # ---- Squeeze: global average pool over S (two-stage reduction) ----
    if s % _LANES == 0 and s > _LANES and (s // _LANES) <= _MAX_UNROLL_CHUNKS:
        nchunks = s // _LANES
        # VPU adds over lane-aligned 128-wide chunks, f32 accumulator.
        acc = x[:, :, 0:_LANES].astype(jnp.float32)
        for k in range(1, nchunks):
            acc = acc + x[:, :, k * _LANES:(k + 1) * _LANES].astype(jnp.float32)
        pooled = jnp.sum(acc, axis=-1)                    # one cross-lane reduce
    else:
        pooled = jnp.sum(x, axis=-1, dtype=jnp.float32)   # fallback (S not /128)
    pooled = pooled * jnp.float32(1.0 / s)                # (TB, C)

    # ---- Excite: fc1 (C -> Cr) + ReLU, fc2 (Cr -> C) + sigmoid ----
    # Weights arrive pre-transposed: w1t (C, Cr), w2t (Cr, C).
    h = jnp.dot(pooled, w1t_ref[...],
                preferred_element_type=jnp.float32) + b1_ref[...]   # (TB, Cr)
    h = jnp.maximum(h, 0.0)
    g = jnp.dot(h, w2t_ref[...],
                preferred_element_type=jnp.float32) + b2_ref[...]   # (TB, C)
    g = jax.nn.sigmoid(g)

    # ---- Scale: broadcast per-channel gate over spatial dim, native dtype ----
    o_ref[...] = (x * g.astype(x.dtype)[:, :, None]).astype(o_ref.dtype)


def _pick_batch_tile(n, bytes_per_sample, vmem_limit):
    """Largest divisor of n whose (in + out, double-buffered) blocks fit VMEM,
    while keeping at least 2 grid steps when n >= 2 (megacore sharding)."""
    block_budget = max(bytes_per_sample, (vmem_limit - (2 << 20)) // 4)
    max_tb = max(1, block_budget // bytes_per_sample)
    target = min(n, max_tb)
    if n >= 2:
        target = min(target, max(1, n // 2))
    tb = 1
    for cand in range(1, int(target) + 1):
        if n % cand == 0:
            tb = cand
    return tb


def se_module(x, w1, b1, w2, b2):
    """x: (N, C, D, H, W); w1: (Cr, C); b1: (Cr,); w2: (C, Cr); b2: (C,)."""
    n, c, d, h, w = x.shape
    s = d * h * w
    cr = w1.shape[0]
    dtype_bytes = jnp.dtype(x.dtype).itemsize
    bytes_per_sample = c * s * dtype_bytes

    # VMEM sizing per generation (v5e/v6e: 128 MiB, v7x: 64 MiB per TC).
    try:
        info = pltpu.get_tpu_info()
        vmem_phys = int(getattr(info, "vmem_capacity_bytes", 64 << 20))
    except Exception:
        vmem_phys = 64 << 20  # conservative default (v7x per-TC VMEM)
    vmem_limit = int(min(vmem_phys * 3 // 4, 100 << 20))

    tb = _pick_batch_tile(n, bytes_per_sample, vmem_limit)
    # TODO(synk): if a single (1, C, S) sample block ever exceeds vmem_limit,
    # switch to a spatially tiled two-phase variant (pool pass + scale pass).

    x2 = x.reshape(n, c, s)
    w1t = jnp.transpose(w1)        # (C, Cr) — transpose once in the wrapper
    w2t = jnp.transpose(w2)        # (Cr, C)
    b1_2 = b1.reshape(1, cr)
    b2_2 = b2.reshape(1, c)

    cost = pl.CostEstimate(
        flops=int(3 * n * c * s + 4 * n * c * cr),
        transcendentals=int(n * c),
        bytes_accessed=int(2 * n * c * s * dtype_bytes
                           + (2 * c * cr + c + cr) * dtype_bytes),
    )

    out = pl.pallas_call(
        _se_kernel,
        out_shape=jax.ShapeDtypeStruct((n, c, s), x.dtype),
        grid_spec=pltpu.PrefetchScalarGridSpec(
            num_scalar_prefetch=0,
            grid=(n // tb,),
            in_specs=[
                pl.BlockSpec((tb, c, s), lambda i: (i, 0, 0)),   # x batch tile
                pl.BlockSpec((c, cr), lambda i: (0, 0)),         # w1.T (resident)
                pl.BlockSpec((1, cr), lambda i: (0, 0)),         # b1
                pl.BlockSpec((cr, c), lambda i: (0, 0)),         # w2.T (resident)
                pl.BlockSpec((1, c), lambda i: (0, 0)),          # b2
            ],
            out_specs=pl.BlockSpec((tb, c, s), lambda i: (i, 0, 0)),
        ),
        compiler_params=pltpu.CompilerParams(
            dimension_semantics=("parallel",),
            vmem_limit_bytes=vmem_limit,
        ),
        cost_estimate=cost,
    )(x2, w1t, b1_2, w2t, b2_2)

    return out.reshape(n, c, d, h, w)


def se_module_ref(x, w1, b1, w2, b2):
    # Pure-JAX reference mirroring the PyTorch forward.
    pooled = jnp.mean(x, axis=(2, 3, 4))                      # (N, C)
    h = jnp.maximum(pooled @ w1.T + b1, 0.0)                  # (N, Cr)
    g = jax.nn.sigmoid(h @ w2.T + b2)                         # (N, C)
    return x * g[:, :, None, None, None]


if __name__ == "__main__":
    # Small shapes consistent with the module: channels=16, reduction=4
    N, C, D, H, W = 2, 16, 4, 8, 8
    reduction = 4
    Cr = C // reduction

    key = jax.random.PRNGKey(0)
    kx, kw1, kb1, kw2, kb2 = jax.random.split(key, 5)

    x = jax.random.normal(kx, (N, C, D, H, W), dtype=jnp.float32)
    # Deterministic synthetic params (shapes match Conv3d(C, Cr, 1) / Conv3d(Cr, C, 1))
    w1 = jax.random.normal(kw1, (Cr, C), dtype=jnp.float32) * (1.0 / C) ** 0.5
    b1 = jax.random.normal(kb1, (Cr,), dtype=jnp.float32) * 0.1
    w2 = jax.random.normal(kw2, (C, Cr), dtype=jnp.float32) * (1.0 / Cr) ** 0.5
    b2 = jax.random.normal(kb2, (C,), dtype=jnp.float32) * 0.1

    out = se_module(x, w1, b1, w2, b2)
    out = jax.block_until_ready(out)

    ref = se_module_ref(x, w1, b1, w2, b2)
    assert out.shape == x.shape
    assert jnp.allclose(out, ref, atol=1e-5, rtol=1e-5), "mismatch vs reference"

    print("KERNEL_OK")
</pallas_src>

<mosaic_0001>
module attributes {stable_mosaic.version = 11 : i64} {
  func.func @_se_kernel(%arg0: i32, %arg1: memref<1x16x256xf32, #tpu.memory_space<vmem>>, %arg2: memref<16x4xf32, #tpu.memory_space<vmem>>, %arg3: memref<1x4xf32, #tpu.memory_space<vmem>>, %arg4: memref<4x16xf32, #tpu.memory_space<vmem>>, %arg5: memref<1x16xf32, #tpu.memory_space<vmem>>, %arg6: memref<1x16x256xf32, #tpu.memory_space<vmem>>) attributes {dimension_semantics = [#tpu.dimension_semantics<parallel>], iteration_bounds = array<i64: 2>, scalar_prefetch = 0 : i64, scratch_operands = 0 : i64, tpu.core_type = #tpu.core_type<tc>, window_params = [{transform_indices = @transform_0, window_bounds = array<i64: 1, 16, 256>}, {pipeline_mode = #tpu.pipeline_mode<synchronous>, transform_indices = @transform_1, window_bounds = array<i64: 16, 4>}, {pipeline_mode = #tpu.pipeline_mode<synchronous>, transform_indices = @transform_2, window_bounds = array<i64: 1, 4>}, {pipeline_mode = #tpu.pipeline_mode<synchronous>, transform_indices = @transform_3, window_bounds = array<i64: 4, 16>}, {pipeline_mode = #tpu.pipeline_mode<synchronous>, transform_indices = @transform_4, window_bounds = array<i64: 1, 16>}, {transform_indices = @transform_5, window_bounds = array<i64: 1, 16, 256>}]} {
    %c0 = arith.constant 0 : index
    %c0_0 = arith.constant 0 : index
    %c0_1 = arith.constant 0 : index
    %0 = vector.load %arg1[%c0, %c0_0, %c0_1] : memref<1x16x256xf32, #tpu.memory_space<vmem>>, vector<1x16x256xf32>
    %1 = vector.extract_strided_slice %0 {offsets = [0, 0, 0], sizes = [1, 16, 128], strides = [1, 1, 1]} : vector<1x16x256xf32> to vector<1x16x128xf32>
    %2 = vector.extract_strided_slice %0 {offsets = [0, 0, 128], sizes = [1, 16, 128], strides = [1, 1, 1]} : vector<1x16x256xf32> to vector<1x16x128xf32>
    %3 = arith.addf %1, %2 : vector<1x16x128xf32>
    %cst = arith.constant dense<0.000000e+00> : vector<1x16xf32>
    %4 = vector.multi_reduction <add>, %3, %cst [2] : vector<1x16x128xf32> to vector<1x16xf32>
    %cst_2 = arith.constant 3.906250e-03 : f32
    %5 = vector.broadcast %cst_2 : f32 to vector<1x16xf32>
    %6 = arith.mulf %4, %5 : vector<1x16xf32>
    %c0_3 = arith.constant 0 : index
    %c0_4 = arith.constant 0 : index
    %7 = vector.load %arg2[%c0_3, %c0_4] : memref<16x4xf32, #tpu.memory_space<vmem>>, vector<16x4xf32>
    %cst_5 = arith.constant dense<0.000000e+00> : vector<1x4xf32>
    %8 = tpu.matmul %6, %7, %cst_5 {dimension_numbers = #tpu.dot_dimension_numbers<[1], [0], [0], [1], [0, 0, 1, 1], [], []>} : vector<1x16xf32>, vector<16x4xf32>, vector<1x4xf32> -> vector<1x4xf32>
    %c0_6 = arith.constant 0 : index
    %c0_7 = arith.constant 0 : index
    %9 = vector.load %arg3[%c0_6, %c0_7] : memref<1x4xf32, #tpu.memory_space<vmem>>, vector<1x4xf32>
    %10 = arith.addf %8, %9 : vector<1x4xf32>
    %cst_8 = arith.constant 0.000000e+00 : f32
    %11 = vector.broadcast %cst_8 : f32 to vector<1x4xf32>
    %12 = arith.maximumf %10, %11 : vector<1x4xf32>
    %c0_9 = arith.constant 0 : index
    %c0_10 = arith.constant 0 : index
    %13 = vector.load %arg4[%c0_9, %c0_10] : memref<4x16xf32, #tpu.memory_space<vmem>>, vector<4x16xf32>
    %cst_11 = arith.constant dense<0.000000e+00> : vector<1x16xf32>
    %14 = tpu.matmul %12, %13, %cst_11 {dimension_numbers = #tpu.dot_dimension_numbers<[1], [0], [0], [1], [0, 0, 1, 1], [], []>} : vector<1x4xf32>, vector<4x16xf32>, vector<1x16xf32> -> vector<1x16xf32>
    %c0_12 = arith.constant 0 : index
    %c0_13 = arith.constant 0 : index
    %15 = vector.load %arg5[%c0_12, %c0_13] : memref<1x16xf32, #tpu.memory_space<vmem>>, vector<1x16xf32>
    %16 = arith.addf %14, %15 : vector<1x16xf32>
    %17 = arith.negf %16 : vector<1x16xf32>
    %18 = math.exp %17 : vector<1x16xf32>
    %cst_14 = arith.constant 1.000000e+00 : f32
    %19 = vector.broadcast %cst_14 : f32 to vector<1x16xf32>
    %20 = arith.addf %19, %18 : vector<1x16xf32>
    %21 = arith.divf %19, %20 : vector<1x16xf32>
    %22 = vector.shape_cast %21 : vector<1x16xf32> to vector<1x16x1xf32>
    %23 = vector.broadcast %22 : vector<1x16x1xf32> to vector<1x16x256xf32>
    %24 = arith.mulf %0, %23 : vector<1x16x256xf32>
    %c0_15 = arith.constant 0 : index
    %c0_16 = arith.constant 0 : index
    %c0_17 = arith.constant 0 : index
    %25 = vector.load %arg6[%c0_15, %c0_16, %c0_17] : memref<1x16x256xf32, #tpu.memory_space<vmem>>, vector<1x16x256xf32>
    tpu.vector_store %arg6[%c0_15, %c0_16, %c0_17], %24 {strides = array<i32>} : memref<1x16x256xf32, #tpu.memory_space<vmem>>, vector<1x16x256xf32>,
    return
  }
  func.func @transform_0(%arg0: i32) -> (i32, i32, i32) {
    %c0_i32 = arith.constant 0 : i32
    %c0_i32_0 = arith.constant 0 : i32
    %c0_i32_1 = arith.constant 0 : i32
    return %arg0, %c0_i32, %c0_i32_0 : i32, i32, i32
  }
  func.func @transform_1(%arg0: i32) -> (i32, i32) {
    %c0_i32 = arith.constant 0 : i32
    %c0_i32_0 = arith.constant 0 : i32
    %c0_i32_1 = arith.constant 0 : i32
    return %c0_i32, %c0_i32_0 : i32, i32
  }
  func.func @transform_2(%arg0: i32) -> (i32, i32) {
    %c0_i32 = arith.constant 0 : i32
    %c0_i32_0 = arith.constant 0 : i32
    %c0_i32_1 = arith.constant 0 : i32
    return %c0_i32, %c0_i32_0 : i32, i32
  }
  func.func @transform_3(%arg0: i32) -> (i32, i32) {
    %c0_i32 = arith.constant 0 : i32
    %c0_i32_0 = arith.constant 0 : i32
    %c0_i32_1 = arith.constant 0 : i32
    return %c0_i32, %c0_i32_0 : i32, i32
  }
  func.func @transform_4(%arg0: i32) -> (i32, i32) {
    %c0_i32 = arith.constant 0 : i32
    %c0_i32_0 = arith.constant 0 : i32
    %c0_i32_1 = arith.constant 0 : i32
    return %c0_i32, %c0_i32_0 : i32, i32
  }
  func.func @transform_5(%arg0: i32) -> (i32, i32, i32) {
    %c0_i32 = arith.constant 0 : i32
    %c0_i32_0 = arith.constant 0 : i32
    %c0_i32_1 = arith.constant 0 : i32
    return %arg0, %c0_i32, %c0_i32_0 : i32, i32, i32
  }
}

</mosaic_0001>

<llo_original>
// kernel: tpu_custom_call.1
$region0: #{tpu_custom_call.1}
  #allocation0 [shape = 'u32[]', space=smem, size = 0x4, offset = 0x4, fixed_abs, tag = 'smem constant byte address 0x4 - core index']
  #allocation1 [shape = 'u32[144,128]{1,0:T(1,128)}', space=vmem, size = 0x12000, scoped, tag = 'internal scratch']
  %s0 = inlined_call_operand.hbm [shape: f32[2,16,256], index: 0, kind: input, shape index: {}]
  %s1 = inlined_call_operand.vmem [shape: f32[16,4], index: 1, kind: input, shape index: {}]
  %s2 = inlined_call_operand.vmem [shape: f32[1,4], index: 2, kind: input, shape index: {}]
  %s3 = inlined_call_operand.vmem [shape: f32[4,16], index: 3, kind: input, shape index: {}]
  %s4 = inlined_call_operand.vmem [shape: f32[1,16], index: 4, kind: input, shape index: {}]
  %s5 = inlined_call_operand.hbm [shape: f32[2,16,256], index: 5, kind: output, shape index: {}]
  %s6 = sld [smem:[#allocation0]]
  $region57: #{tpu_custom_call.1} parent=0
    _
  %s8 = ssub.s32 1, %s6
  %s9 = scalar_select 0, %s8, %s6
  $region1: #{tpu_custom_call.1} parent=0
    #allocation2 [shape = 'u8[32768]{0}', space=vmem, size = 0x8000, scoped, tag = 'input window, operand 0']
    #allocation3 [shape = 's32[2]{0}', space=sflag, size = 0x8, scoped, tag = 'scoped memory for tpu_custom_call.1']
    #allocation4 [shape = 's32[2]{0}', space=sflag, size = 0x8, scoped, tag = 'scoped memory for tpu_custom_call.1']
    #allocation5 [shape = 'u8[32768]{0}', space=vmem, size = 0x8000, scoped, tag = 'output window, operand 0']
    %10 = vsyncpa [#allocation3], 0
    %s11 = scalar_lea.sflag [#allocation3], 1
    %12 = vsyncpa %s11, 0
    %13 = vsyncpa [#allocation4], 0
    %s14 = scalar_lea.sflag [#allocation4], 1
    %15 = vsyncpa %s14, 0
    loop: start=0, step=1, limit=4
    $region2: #{tpu_custom_call.1} parent=1 // loop_pre_header
      _
    $region3: #{tpu_custom_call.1} parent=1 // loop_header
      %s17 = sphi 0, %s21
      %p18 = scmp.ge.s32.totalorder %s17, 4
      %s27 = sphi 0, %s29
      %s30 = sphi 0, %s27
      %s31 = sphi 0, %s30
      %s47 = sphi 0, %s31
      %s51 = sphi 0, %s51
      %s53 = sphi 0, %s51
      %s54 = sphi 0, %s53
      %s68 = sphi 0, %s54
      %s72 = sphi 0, %s72
      %s74 = sphi 0, %s72
      %s75 = sphi 0, %s74
      %s89 = sphi 0, %s75
      %s93 = sphi 0, %s93
      %s95 = sphi 0, %s93
      %s96 = sphi 0, %s95
      %s110 = sphi 0, %s96
      %s114 = sphi 0, %s114
      %s116 = sphi 0, %s114
      %s117 = sphi 0, %s116
      %s131 = sphi 0, %s117
      %s137 = sphi 0, %s139
      %s140 = sphi 0, %s137
      %s141 = sphi 0, %s140
      %s157 = sphi 0, %s141
    $region4: #{tpu_custom_call.1} parent=1 // loop_header_branch
      %20 = sbr.rel (%p18) target = $region8
    $region5: #{tpu_custom_call.1} parent=1 // loop_body
      %s22 = ssub.s32 %s17, 1
      %s23 = ssub.s32 %s17, 2
      %s24 = sadd.s32 %s17, 1
      %s25 = ssub.s32 %s17, %s24
      %p26 = scmp.eq.s32.totalorder %s25, 0
      %s28 = sadd.s32 %s27, 1
      %s29 = scalar_select %p26, %s27, %s28
      %p32 = pneg %p26
      %p33 = scmp.eq.s32.totalorder %s17, 1
      %p34 = por %p32, %p33
      %p35 = scmp.ne.s32.totalorder %s27, %s30
      %p36 = scmp.eq.s32.totalorder %s17, 0
      %p37 = por %p35, %p36
      %p38 = scmp.ne.s32.totalorder %s27, %s30
      %p39 = scmp.eq.s32.totalorder %s22, 1
      %p40 = por %p38, %p39
      %p41 = scmp.ne.s32.totalorder %s30, %s31
      %p42 = scmp.eq.s32.totalorder %s22, 0
      %p43 = por %p41, %p42
      %p44 = scmp.ne.s32.totalorder %s30, %s31
      %p45 = scmp.eq.s32.totalorder %s23, 1
      %p46 = por %p44, %p45
      %p48 = scmp.ne.s32.totalorder %s31, %s47
      %p49 = scmp.eq.s32.totalorder %s23, 0
      %p50 = por %p48, %p49
      %s52 = sadd.s32 %s51, 1
      %p55 = scmp.eq.s32.totalorder %s17, 1
      %p56 = scmp.ne.s32.totalorder %s51, %s53
      %p57 = scmp.eq.s32.totalorder %s17, 0
      %p58 = por %p56, %p57
      %p59 = scmp.ne.s32.totalorder %s51, %s53
      %p60 = scmp.eq.s32.totalorder %s22, 1
      %p61 = por %p59, %p60
      %p62 = scmp.ne.s32.totalorder %s53, %s54
      %p63 = scmp.eq.s32.totalorder %s22, 0
      %p64 = por %p62, %p63
      %p65 = scmp.ne.s32.totalorder %s53, %s54
      %p66 = scmp.eq.s32.totalorder %s23, 1
      %p67 = por %p65, %p66
      %p69 = scmp.ne.s32.totalorder %s54, %s68
      %p70 = scmp.eq.s32.totalorder %s23, 0
      %p71 = por %p69, %p70
      %s73 = sadd.s32 %s72, 1
      %p76 = scmp.eq.s32.totalorder %s17, 1
      %p77 = scmp.ne.s32.totalorder %s72, %s74
      %p78 = scmp.eq.s32.totalorder %s17, 0
      %p79 = por %p77, %p78
      %p80 = scmp.ne.s32.totalorder %s72, %s74
      %p81 = scmp.eq.s32.totalorder %s22, 1
      %p82 = por %p80, %p81
      %p83 = scmp.ne.s32.totalorder %s74, %s75
      %p84 = scmp.eq.s32.totalorder %s22, 0
      %p85 = por %p83, %p84
      %p86 = scmp.ne.s32.totalorder %s74, %s75
      %p87 = scmp.eq.s32.totalorder %s23, 1
      %p88 = por %p86, %p87
      %p90 = scmp.ne.s32.totalorder %s75, %s89
      %p91 = scmp.eq.s32.totalorder %s23, 0
      %p92 = por %p90, %p91
      %s94 = sadd.s32 %s93, 1
      %p97 = scmp.eq.s32.totalorder %s17, 1
      %p98 = scmp.ne.s32.totalorder %s93, %s95
      %p99 = scmp.eq.s32.totalorder %s17, 0
      %p100 = por %p98, %p99
      %p101 = scmp.ne.s32.totalorder %s93, %s95
      %p102 = scmp.eq.s32.totalorder %s22, 1
      %p103 = por %p101, %p102
      %p104 = scmp.ne.s32.totalorder %s95, %s96
      %p105 = scmp.eq.s32.totalorder %s22, 0
      %p106 = por %p104, %p105
      %p107 = scmp.ne.s32.totalorder %s95, %s96
      %p108 = scmp.eq.s32.totalorder %s23, 1
      %p109 = por %p107, %p108
      %p111 = scmp.ne.s32.totalorder %s96, %s110
      %p112 = scmp.eq.s32.totalorder %s23, 0
      %p113 = por %p111, %p112
      %s115 = sadd.s32 %s114, 1
      %p118 = scmp.eq.s32.totalorder %s17, 1
      %p119 = scmp.ne.s32.totalorder %s114, %s116
      %p120 = scmp.eq.s32.totalorder %s17, 0
      %p121 = por %p119, %p120
      %p122 = scmp.ne.s32.totalorder %s114, %s116
      %p123 = scmp.eq.s32.totalorder %s22, 1
      %p124 = por %p122, %p123
      %p125 = scmp.ne.s32.totalorder %s116, %s117
      %p126 = scmp.eq.s32.totalorder %s22, 0
      %p127 = por %p125, %p126
      %p128 = scmp.ne.s32.totalorder %s116, %s117
      %p129 = scmp.eq.s32.totalorder %s23, 1
      %p130 = por %p128, %p129
      %p132 = scmp.ne.s32.totalorder %s117, %s131
      %p133 = scmp.eq.s32.totalorder %s23, 0
      %p134 = por %p132, %p133
      %s135 = ssub.s32 %s17, %s24
      %p136 = scmp.eq.s32.totalorder %s135, 0
      %s138 = sadd.s32 %s137, 1
      %s139 = scalar_select %p136, %s137, %s138
      %p142 = pneg %p136
      %p143 = scmp.eq.s32.totalorder %s17, 1
      %p144 = por %p142, %p143
      %p145 = scmp.ne.s32.totalorder %s137, %s140
      %p146 = scmp.eq.s32.totalorder %s17, 0
      %p147 = por %p145, %p146
      %p148 = scmp.ne.s32.totalorder %s137, %s140
      %p149 = scmp.eq.s32.totalorder %s22, 1
      %p150 = por %p148, %p149
      %p151 = scmp.ne.s32.totalorder %s140, %s141
      %p152 = scmp.eq.s32.totalorder %s22, 0
      %p153 = por %p151, %p152
      %p154 = scmp.ne.s32.totalorder %s140, %s141
      %p155 = scmp.eq.s32.totalorder %s23, 1
      %p156 = por %p154, %p155
      %p158 = scmp.ne.s32.totalorder %s141, %s157
      %p159 = scmp.eq.s32.totalorder %s23, 0
      %p160 = por %p158, %p159
      %p161 = scmp.le.s32.totalorder 1, %s17
      %p162 = scmp.lt.s32.totalorder %s17, 3
      %p163 = pnand %p161, %p162
      %p164 = pneg %p163
      // Predicated region
      $region9: #{tpu_custom_call.1} parent=5 // pred_check
        _
      $region10: #{tpu_custom_call.1} parent=5 // pred_check_branch
        %166 = sbr.rel (%p163) target = $region12
      $region11: #{tpu_custom_call.1} parent=5 // pred_region
        %s167 = ssub.s32 %s17, 1
        // Predicated region
        $region13: #{tpu_custom_call.1} parent=11 // pred_check
          %p168 = pneg %p64
        $region14: #{tpu_custom_call.1} parent=11 // pred_check_branch
          %170 = sbr.rel (%p168) target = $region16
        $region15: #{tpu_custom_call.1} parent=11 // pred_region
          _
        $region16: #{tpu_custom_call.1} parent=11 // pred_fallthru
          _
        // Predicated region
        $region17: #{tpu_custom_call.1} parent=11 // pred_check
          %p171 = pneg %p85
        $region18: #{tpu_custom_call.1} parent=11 // pred_check_branch
          %173 = sbr.rel (%p171) target = $region20
        $region19: #{tpu_custom_call.1} parent=11 // pred_region
          _
        $region20: #{tpu_custom_call.1} parent=11 // pred_fallthru
          _
        // Predicated region
        $region21: #{tpu_custom_call.1} parent=11 // pred_check
          %p174 = pneg %p106
        $region22: #{tpu_custom_call.1} parent=11 // pred_check_branch
          %176 = sbr.rel (%p174) target = $region24
        $region23: #{tpu_custom_call.1} parent=11 // pred_region
          _
        $region24: #{tpu_custom_call.1} parent=11 // pred_fallthru
          _
        // Predicated region
        $region25: #{tpu_custom_call.1} parent=11 // pred_check
          %p177 = pneg %p127
        $region26: #{tpu_custom_call.1} parent=11 // pred_check_branch
          %179 = sbr.rel (%p177) target = $region28
        $region27: #{tpu_custom_call.1} parent=11 // pred_region
          _
        $region28: #{tpu_custom_call.1} parent=11 // pred_fallthru
          _
      $region12: #{tpu_custom_call.1} parent=5 // pred_fallthru
        _
      %p180 = scmp.lt.s32.totalorder %s17, 2
      // Predicated region
      $region29: #{tpu_custom_call.1} parent=5 // pred_check
        %p181 = pneg %p180
      $region30: #{tpu_custom_call.1} parent=5 // pred_check_branch
        %183 = sbr.rel (%p181) target = $region32
      $region31: #{tpu_custom_call.1} parent=5 // pred_region
        // Predicated region
        $region33: #{tpu_custom_call.1} parent=31 // pred_check
          %p184 = pneg %p37
        $region34: #{tpu_custom_call.1} parent=31 // pred_check_branch
          %186 = sbr.rel (%p184) target = $region36
        $region35: #{tpu_custom_call.1} parent=31 // pred_region
          %s187 = sand.u32 %s27, 1
          %s188 = scalar_lea.sflag [#allocation3], %s187
          %s189 = sand.u32 %s27, 1
          %s190 = smul.addr %s189, 32
          %s191 = scalar_lea.vmem [#allocation2], %s190
          %s193 = ssub.s32 512, 512
          %194 = vsyncadd %s188, %s193
          %s195 = smul.addr %s17, 4
          %s196 = smul.addr %s195, 128
          %s197 = scalar_lea.hbm %s0, %s196
          %s198 = sshll.u32 %s191, 4
          %s199 = int_to_ptr.vmem [resolvable:$true] %s198
          %204 = dma.hbm_to_vmem [thread:$0]  %s197, 512, %s199, %s188, 256, 256, 16
        $region36: #{tpu_custom_call.1} parent=31 // pred_fallthru
          _
      $region32: #{tpu_custom_call.1} parent=5 // pred_fallthru
        _
      %p205 = scmp.le.s32.totalorder 1, %s17
      %p206 = scmp.lt.s32.totalorder %s17, 3
      %p207 = pnand %p205, %p206
      %p208 = pneg %p207
      // Predicated region
      $region37: #{tpu_custom_call.1} parent=5 // pred_check
        _
      $region38: #{tpu_custom_call.1} parent=5 // pred_check_branch
        %210 = sbr.rel (%p207) target = $region40
      $region39: #{tpu_custom_call.1} parent=5 // pred_region
        %s211 = ssub.s32 %s17, 1
        %s212 = sand.u32 %s30, 1
        %s213 = scalar_lea.sflag [#allocation3], %s212
        %s214 = sand.u32 %s30, 1
        %s215 = smul.addr %s214, 32
        %s216 = scalar_lea.vmem [#allocation2], %s215
        // Predicated region
        $region41: #{tpu_custom_call.1} parent=39 // pred_check
          %p217 = pneg %p43
        $region42: #{tpu_custom_call.1} parent=39 // pred_check_branch
          %219 = sbr.rel (%p217) target = $region44
        $region43: #{tpu_custom_call.1} parent=39 // pred_region
          %220 = dma.done %s213, 512
        $region44: #{tpu_custom_call.1} parent=39 // pred_fallthru
          _
        %s221 = sand.u32 %s30, 1
        %s222 = scalar_lea.sflag [#allocation3], %s221
        %s223 = sand.u32 %s30, 1
        %s224 = smul.addr %s223, 32
        %s225 = scalar_lea.vmem [#allocation2], %s224
        %p226 = pneg %p43
        %p227 = pneg %p40
        %p228 = pneg %p64
        %p229 = pneg %p61
        %p230 = pneg %p85
        %p231 = pneg %p82
        %p232 = pneg %p106
        %p233 = pneg %p103
        %p234 = pneg %p127
        %p235 = pneg %p124
        %p236 = pneg %p153
        %p237 = pneg %p150
        %s238 = sand.u32 %s140, 1
        %s239 = scalar_lea.sflag [#allocation4], %s238
        %s240 = sand.u32 %s140, 1
        %s241 = smul.addr %s240, 32
        %s242 = scalar_lea.vmem [#allocation5], %s241
        %v243 = vld [vmem:[%s216] sm:$0xff]
        %v244 = vld [vmem:[%s216 + $0x8] sm:$0xff]
        %v245 = vld [vmem:[%s216 + $0x10] sm:$0xff]
        %v246 = vld [vmem:[%s216 + $0x18] sm:$0xff]
        %v247 = vadd.f32 %v243, %v244
        %v248 = vadd.f32 %v245, %v246
        %249 = vadd.xlane.f32.xlu0 %v247
        %v250 = vpop.xlane.xlu0 %249
        %251 = vadd.xlane.f32.xlu0 %v248
        %v252 = vpop.xlane.xlu0 %251
        %v253 = vmul.f32 %v250, 0.00390625
        %v254 = vmul.f32 %v252, 0.00390625
        %v255 = vld [vmem:[%s1] sm:$0xff]
        %v256 = vld [vmem:[%s1 + $0x8] sm:$0xff]
        %v257 = vld [vmem:[%s2] sm:$0x1]
        %v260 = vlaneseq
        %v261 = vand.u32 %v260, 127
        %v262 = vlaneseq
        %v263 = vshrl.u32 %v262, 7
        %v264 = vsub.s32 %v261, %v263
        %v265 = vrot.slane %v253, %v264
        %v266 = vadd.s32 %v261, 4294967288
        %v267 = vlaneseq
        %v268 = vshrl.u32 %v267, 7
        %v269 = vsub.s32 %v266, %v268
        %v270 = vrot.slane %v254, %v269
        %vm271 = vcmask 130112
        %v272 = vsel %vm271, %v270, %v265
        %vm273 = vcmask 130048
        %v274 = vsel %vm273, %v272, 0
        %276 = vmatprep.subr.mxu0 0.0
        %277 = vmatpush1.msra.mxu0 %v255
        %278 = vmatprep.subr.mxu0 0.0
        %279 = vmatpush1.msra.mxu0 %v256
        %280 = vmatprep.subr.mxu0 0.0
        %281 = vmatpush1.msra.mxu0 0.0
        %282 = vmatprep.subr.mxu0 0.0
        %283 = vmatpush1.msra.mxu0 0.0
        %284 = vmatprep.subr.mxu0 0.0
        %285 = vmatpush1.msra.mxu0 0.0
        %286 = vmatprep.subr.mxu0 0.0
        %287 = vmatpush1.msra.mxu0 0.0
        %288 = vmatprep.subr.mxu0 0.0
        %289 = vmatpush1.msra.mxu0 0.0
        %290 = vmatprep.subr.mxu0 0.0
        %291 = vmatpush1.msra.mxu0 0.0
        %292 = vmatprep.subr.mxu0 0.0
        %293 = vmatpush1.msra.mxu0 0.0
        %294 = vmatprep.subr.mxu0 0.0
        %295 = vmatpush1.msra.mxu0 0.0
        %296 = vmatprep.subr.mxu0 0.0
        %297 = vmatpush1.msra.mxu0 0.0
        %298 = vmatprep.subr.mxu0 0.0
        %299 = vmatpush1.msra.mxu0 0.0
        %300 = vmatprep.subr.mxu0 0.0
        %301 = vmatpush1.msra.mxu0 0.0
        %302 = vmatprep.subr.mxu0 0.0
        %303 = vmatpush1.msra.mxu0 0.0
        %304 = vmatprep.subr.mxu0 0.0
        %305 = vmatpush1.msra.mxu0 0.0
        %306 = vmatprep.subr.mxu0 0.0
        %307 = vmatpush1.msra.mxu0 0.0
        %308 = vmatprep.subr.mxu0 0.0
        %309 = vmatpush1.msra.mxu0 0.0
        %310 = vmatprep.subr.mxu0 0.0
        %311 = vmatpush1.msra.mxu0 0.0
        %312 = vmatprep.subr.mxu0 0.0
        %313 = vmatpush1.msra.mxu0 0.0
        %314 = vmatprep.subr.mxu0 0.0
        %315 = vmatpush1.msra.mxu0 0.0
        %316 = vmatprep.subr.mxu0 0.0
        %317 = vmatpush1.msra.mxu0 0.0
        %318 = vmatprep.subr.mxu0 0.0
        %319 = vmatpush1.msra.mxu0 0.0
        %320 = vmatprep.subr.mxu0 0.0
        %321 = vmatpush1.msra.mxu0 0.0
        %322 = vmatprep.subr.mxu0 0.0
        %323 = vmatpush1.msra.mxu0 0.0
        %324 = vmatprep.subr.mxu0 0.0
        %325 = vmatpush1.msra.mxu0 0.0
        %326 = vmatprep.subr.mxu0 0.0
        %327 = vmatpush1.msra.mxu0 0.0
        %328 = vmatprep.subr.mxu0 0.0
        %329 = vmatpush1.msra.mxu0 0.0
        %330 = vmatprep.subr.mxu0 0.0
        %331 = vmatpush1.msra.mxu0 0.0
        %332 = vmatprep.subr.mxu0 0.0
        %333 = vmatpush1.msra.mxu0 0.0
        %334 = vmatprep.subr.mxu0 0.0
        %335 = vmatpush1.msra.mxu0 0.0
        %336 = vmatprep.subr.mxu0 0.0
        %337 = vmatpush1.msra.mxu0 0.0
        %338 = vmatprep.subr.mxu0 0.0
        %339 = vmatpush1.msra.mxu0 0.0
        %340 = vmatprep.mubr.f32.mxu0 0.0
        %341 = vmatmul.mubr.f32.gmra.mrb[0].mxu0 %v274
        %v342 = vpop.f32.mrb[0].mxu0
        %v343 = vadd.f32 %v257, %v342
        %v344 = vpop.f32.mrb[0].mxu0
        %345 = vdwg.mxu0
        %v346 = vmax.f32 %v343, 0.0
        %v347 = vld [vmem:[%s3] sm:$0xf]
        %v348 = vld [vmem:[%s4] sm:$0x1]
        %vm349 = vcmask 31744
        %v351 = vsel %vm349, %v346, 0
        %vm353 = vcmask 1043456
        %v355 = vsel %vm353, %v347, 0
        %357 = vmatprep.subr.mxu0 0.0
        %358 = vmatpush1.msra.mxu0 %v355
        %359 = vmatprep.subr.mxu0 0.0
        %360 = vmatpush1.msra.mxu0 0.0
        %361 = vmatprep.subr.mxu0 0.0
        %362 = vmatpush1.msra.mxu0 0.0
        %363 = vmatprep.subr.mxu0 0.0
        %364 = vmatpush1.msra.mxu0 0.0
        %365 = vmatprep.subr.mxu0 0.0
        %366 = vmatpush1.msra.mxu0 0.0
        %367 = vmatprep.subr.mxu0 0.0
        %368 = vmatpush1.msra.mxu0 0.0
        %369 = vmatprep.subr.mxu0 0.0
        %370 = vmatpush1.msra.mxu0 0.0
        %371 = vmatprep.subr.mxu0 0.0
        %372 = vmatpush1.msra.mxu0 0.0
        %373 = vmatprep.subr.mxu0 0.0
        %374 = vmatpush1.msra.mxu0 0.0
        %375 = vmatprep.subr.mxu0 0.0
        %376 = vmatpush1.msra.mxu0 0.0
        %377 = vmatprep.subr.mxu0 0.0
        %378 = vmatpush1.msra.mxu0 0.0
        %379 = vmatprep.subr.mxu0 0.0
        %380 = vmatpush1.msra.mxu0 0.0
        %381 = vmatprep.subr.mxu0 0.0
        %382 = vmatpush1.msra.mxu0 0.0
        %383 = vmatprep.subr.mxu0 0.0
        %384 = vmatpush1.msra.mxu0 0.0
        %385 = vmatprep.subr.mxu0 0.0
        %386 = vmatpush1.msra.mxu0 0.0
        %387 = vmatprep.subr.mxu0 0.0
        %388 = vmatpush1.msra.mxu0 0.0
        %389 = vmatprep.subr.mxu0 0.0
        %390 = vmatpush1.msra.mxu0 0.0
        %391 = vmatprep.subr.mxu0 0.0
        %392 = vmatpush1.msra.mxu0 0.0
        %393 = vmatprep.subr.mxu0 0.0
        %394 = vmatpush1.msra.mxu0 0.0
        %395 = vmatprep.subr.mxu0 0.0
        %396 = vmatpush1.msra.mxu0 0.0
        %397 = vmatprep.subr.mxu0 0.0
        %398 = vmatpush1.msra.mxu0 0.0
        %399 = vmatprep.subr.mxu0 0.0
        %400 = vmatpush1.msra.mxu0 0.0
        %401 = vmatprep.subr.mxu0 0.0
        %402 = vmatpush1.msra.mxu0 0.0
        %403 = vmatprep.subr.mxu0 0.0
        %404 = vmatpush1.msra.mxu0 0.0
        %405 = vmatprep.subr.mxu0 0.0
        %406 = vmatpush1.msra.mxu0 0.0
        %407 = vmatprep.subr.mxu0 0.0
        %408 = vmatpush1.msra.mxu0 0.0
        %409 = vmatprep.subr.mxu0 0.0
        %410 = vmatpush1.msra.mxu0 0.0
        %411 = vmatprep.subr.mxu0 0.0
        %412 = vmatpush1.msra.mxu0 0.0
        %413 = vmatprep.subr.mxu0 0.0
        %414 = vmatpush1.msra.mxu0 0.0
        %415 = vmatprep.subr.mxu0 0.0
        %416 = vmatpush1.msra.mxu0 0.0
        %417 = vmatprep.subr.mxu0 0.0
        %418 = vmatpush1.msra.mxu0 0.0
        %419 = vmatprep.subr.mxu0 0.0
        %420 = vmatpush1.msra.mxu0 0.0
        %421 = vmatprep.mubr.f32.mxu0 0.0
        %422 = vmatmul.mubr.f32.gmra.mrb[0].mxu0 %v351
        %v423 = vpop.f32.mrb[0].mxu0
        %v424 = vadd.f32 %v348, %v423
        %v425 = vpop.f32.mrb[0].mxu0
        %426 = vdwg.mxu0
        %v427 = vxor.u32 %v424, 2147483648
        %v428 = vmul.f32 %v427, 1.442695
        %v429 = vpow.pop %v428
        %v430 = vadd.f32 %v429, 1.0
        %v431 = vrcp.pop %v430
        %v432 = vmul.f32 1.0, %v431
        %v433 = vlaneseq
        %v434 = vshrl.u32 %v433, 7
        %v435 = vsub.s32 0, %v434
        %v436 = vrot.slane %v432, %v435
        %438 = vbcast.lane.b32.xlu0 %v436, 256
        %v439 = vpop.permute.xlu0 %438
        %s441 = sor.u32 256, 8
        %442 = vbcast.lane.b32.xlu0 %v436, %s441
        %v443 = vpop.permute.xlu0 %442
        %v444 = vmul.f32 %v243, %v439
        %v445 = vmul.f32 %v244, %v439
        %v446 = vmul.f32 %v245, %v443
        %v447 = vmul.f32 %v246, %v443
        %448 = vst [vmem:[%s242] sm:$0xff] %v444
        %449 = vst [vmem:[%s242 + $0x8] sm:$0xff] %v445
        %450 = vst [vmem:[%s242 + $0x10] sm:$0xff] %v446
        %451 = vst [vmem:[%s242 + $0x18] sm:$0xff] %v447
        %s452 = sand.u32 %s140, 1
        %s453 = scalar_lea.sflag [#allocation4], %s452
        %s454 = sand.u32 %s140, 1
        %s455 = smul.addr %s454, 32
        %s456 = scalar_lea.vmem [#allocation5], %s455
        // Predicated region
        $region45: #{tpu_custom_call.1} parent=39 // pred_check
          %p457 = pneg %p150
        $region46: #{tpu_custom_call.1} parent=39 // pred_check_branch
          %459 = sbr.rel (%p457) target = $region48
        $region47: #{tpu_custom_call.1} parent=39 // pred_region
          %s461 = ssub.s32 512, 512
          %462 = vsyncadd %s453, %s461
          %s463 = smul.addr %s22, 4
          %s464 = smul.addr %s463, 128
          %s465 = scalar_lea.hbm %s5, %s464
          %s466 = sshll.u32 %s456, 4
          %s467 = int_to_ptr.vmem [resolvable:$true] %s466
          %472 = dma.vmem_to_hbm [thread:$0]  %s467, 512, %s465, %s453, 256, 256, 16
        $region48: #{tpu_custom_call.1} parent=39 // pred_fallthru
          _
      $region40: #{tpu_custom_call.1} parent=5 // pred_fallthru
        _
      %p473 = scmp.le.s32.totalorder 2, %s17
      // Predicated region
      $region49: #{tpu_custom_call.1} parent=5 // pred_check
        %p474 = pneg %p473
      $region50: #{tpu_custom_call.1} parent=5 // pred_check_branch
        %476 = sbr.rel (%p474) target = $region52
      $region51: #{tpu_custom_call.1} parent=5 // pred_region
        %s477 = ssub.s32 %s17, 2
        // Predicated region
        $region53: #{tpu_custom_call.1} parent=51 // pred_check
          %p478 = pneg %p156
        $region54: #{tpu_custom_call.1} parent=51 // pred_check_branch
          %480 = sbr.rel (%p478) target = $region56
        $region55: #{tpu_custom_call.1} parent=51 // pred_region
          %s481 = sand.u32 %s141, 1
          %s482 = scalar_lea.sflag [#allocation4], %s481
          %s483 = sand.u32 %s141, 1
          %s484 = smul.addr %s483, 32
          %s485 = scalar_lea.vmem [#allocation5], %s484
          %486 = dma.done %s482, 512
        $region56: #{tpu_custom_call.1} parent=51 // pred_fallthru
          _
      $region52: #{tpu_custom_call.1} parent=5 // pred_fallthru
        _
    $region6: #{tpu_custom_call.1} parent=1 // loop_footer
      %s21 = sadd.s32 1, %s17
    $region7: #{tpu_custom_call.1} parent=1 // loop_footer_branch
      %16 = sbr.rel target = $region3
    $region8: #{tpu_custom_call.1} parent=1 // loop_exit
      _
    %487 = vsyncpa [#allocation3], 1
    %s488 = scalar_lea.sflag [#allocation3], 1
    %489 = vsyncpa %s488, 1
    %490 = vsyncpa [#allocation4], 1
    %s491 = scalar_lea.sflag [#allocation4], 1
    %492 = vsyncpa %s491, 1

</llo_original>
